<compile_context>
chip_gen: v7x
topology: tpu7x:2x2x1
jax: 0.10.0
libtpu: 0.0.40
codegen_flags: <defaults>
</compile_context>

<pallas_src>
import functools

import jax
import jax.numpy as jnp
from jax.experimental import pallas as pl
from jax.experimental.pallas import tpu as pltpu


def _focal_loss_kernel(x_ref, tgt_ref, cls_ref, out_ref, *, gamma: float):
    """Per-row (1 - p_k)^gamma * (-log p_k), k = target.

    The class weight is applied outside the kernel (hoisted gather).
    """
    x = x_ref[...]                          # (T, C), native dtype (bf16 stays bf16)
    tgt = tgt_ref[...]                      # (T, 1) int32
    cls = cls_ref[...]                      # (1, C) int32 class-index row (untiled)

    # Numerically stable row-wise softmax stats.  The (T, C) elementwise chain
    # stays in the input dtype (bf16 VPU/EUP on v6e/v7x); the denominator is
    # accumulated in f32.
    x_max = jnp.max(x, axis=1, keepdims=True)                        # (T, 1)
    e = jnp.exp(x - x_max)                                           # (T, C)
    sum_exp = jnp.sum(e.astype(jnp.float32), axis=1, keepdims=True)  # (T, 1) f32

    # Gather only the target logit (one-hot select against the preloaded class
    # index row; no per-step broadcasted_iota, no (T, C) focal/log work).
    onehot = cls == tgt                                              # (T, C) bool
    x_k = jnp.sum(jnp.where(onehot, x, 0), axis=1, keepdims=True)    # (T, 1)

    log_p = (x_k.astype(jnp.float32)
             - x_max.astype(jnp.float32)
             - jnp.log(sum_exp))                                     # (T, 1), <= 0
    p = jnp.exp(log_p)
    one_minus = 1.0 - p

    g = float(gamma)
    if g == 2.0:      # default: two VPU multiplies, EUP left to the softmax exp
        focal = one_minus * one_minus
    elif g == 1.0:
        focal = one_minus
    elif g == 0.0:
        focal = jnp.ones_like(one_minus)
    else:             # general gamma, still only on the (T, 1) column
        focal = jnp.exp(g * jnp.log1p(-p))

    out_ref[...] = (focal * (-log_p)).astype(out_ref.dtype)


def _vmem_budget():
    """(tile-sizing budget, vmem_limit_bytes) derived from the chip's VMEM."""
    phys = 64 * 1024 * 1024                      # conservative default (v7x per-TC)
    try:
        info = pltpu.get_tpu_info()
        phys = int(getattr(info, "vmem_capacity_bytes", phys) or phys)
    except Exception:
        pass
    limit = min(int(phys * 0.85), 112 * 1024 * 1024)   # leave physical headroom
    budget = min(int(phys * 0.5), 64 * 1024 * 1024)    # headroom for temporaries slack
    return budget, limit


def _pick_tile_n(n: int, c: int, in_itemsize: int, vmem_budget: int) -> int:
    """Rows per grid step so input blocks + in-kernel temporaries fit VMEM."""
    c_pad = ((max(c, 128) + 127) // 128) * 128   # lane padding: C<128 pads to 128
    per_row = (2 * c_pad * in_itemsize           # double-buffered logits block
               + 6 * c_pad * 4                   # live (T, C) f32/bool temporaries
               + 2 * 2 * 512)                    # (T,1) target + loss columns, (8,128)-padded, x2 bufs
    tile = max(vmem_budget // per_row, 8)
    if n >= 4096:                                # >=2 grid steps so both v7x TCs get work
        tile = min(tile, -(-n // 2))
    if tile >= n:
        return int(n)                            # single full block (no alignment needed)
    sublane = 8 * max(1, 4 // max(1, in_itemsize))   # 8 (f32) / 16 (bf16) / 32 (int8)
    align = 256 if tile >= 256 else sublane
    return int(max(align, (tile // align) * align))


def focal_loss(logits, target, weight, gamma=2.0, reduction="mean", tile_n=None):
    """logits: (N, C) float, target: (N,) int, weight: (C,) float or int C."""
    n, c = logits.shape
    tgt2d = target.reshape(n, 1).astype(jnp.int32)
    cls_row = jnp.arange(c, dtype=jnp.int32).reshape(1, c)

    budget, vmem_limit = _vmem_budget()
    if tile_n is None:
        tile_n = _pick_tile_n(n, c, jnp.dtype(logits.dtype).itemsize, budget)
    grid_n = pl.cdiv(n, tile_n)

    kernel = functools.partial(_focal_loss_kernel, gamma=float(gamma))

    # Per-sample unweighted focal * NLL; each grid step owns its output block,
    # so the batch axis is "parallel" (sharded across v7x's two TensorCores).
    lk = pl.pallas_call(
        kernel,
        out_shape=jax.ShapeDtypeStruct((n, 1), jnp.float32),
        grid=(grid_n,),
        in_specs=[
            pl.BlockSpec((tile_n, c), lambda i: (i, 0)),   # logits tile
            pl.BlockSpec((tile_n, 1), lambda i: (i, 0)),   # target column
            pl.BlockSpec((1, c), lambda i: (0, 0)),        # class-index row (untiled)
        ],
        out_specs=pl.BlockSpec((tile_n, 1), lambda i: (i, 0)),
        compiler_params=pltpu.CompilerParams(
            dimension_semantics=("parallel",),
            vmem_limit_bytes=int(vmem_limit)),
    )(logits, tgt2d, cls_row)

    # Class-weight gather hoisted out of the kernel (tiny fused XLA gather+mul).
    if isinstance(weight, int):
        wt = jnp.ones((weight,), jnp.float32)     # FocalLoss(weight=int) -> ones
    else:
        wt = jnp.asarray(weight, jnp.float32)
    per_sample = wt[target] * lk[:, 0]

    if reduction == "mean":
        # Parity: this module does loss.mean() (divide by N), not the
        # F.nll_loss-style divide-by-sum-of-target-weights.
        return jnp.sum(per_sample) / jnp.float32(n)
    if reduction == "sum":
        return jnp.sum(per_sample)
    return per_sample    # reduction == 'none'


def _reference_focal_loss(logits, target, weight, gamma=2.0, reduction="mean"):
    """Pure-JAX reference matching the PyTorch module."""
    p = jax.nn.softmax(logits.astype(jnp.float32), axis=1)
    loss = -weight[None, :] * (1.0 - p) ** gamma * jnp.log(p)
    mask = jax.nn.one_hot(target, logits.shape[1], dtype=loss.dtype)
    loss = jnp.sum(loss * mask, axis=1)
    if reduction == "mean":
        return jnp.mean(loss)
    if reduction == "sum":
        return jnp.sum(loss)
    return loss


if __name__ == "__main__":
    key = jax.random.PRNGKey(0)
    k1, k2, k3, k4, k5, k6 = jax.random.split(key, 6)

    # Case 1: small (N, C), gamma=2 fast path, weight given as an int (-> ones).
    N, C = 8, 16
    logits = jax.random.normal(k1, (N, C), dtype=jnp.float32)
    target = jax.random.randint(k2, (N,), 0, C, dtype=jnp.int32)
    loss = jax.block_until_ready(focal_loss(logits, target, C, gamma=2.0))
    ref = _reference_focal_loss(logits, target, jnp.ones((C,), jnp.float32), 2.0)
    assert jnp.allclose(loss, ref, rtol=1e-5, atol=1e-5), (loss, ref)

    # Case 2: batch not divisible by the tile (partial last block) + class weights.
    N2, C2 = 20, 16
    logits2 = jax.random.normal(k3, (N2, C2), dtype=jnp.float32)
    target2 = jax.random.randint(k4, (N2,), 0, C2, dtype=jnp.int32)
    weight2 = jnp.linspace(0.5, 1.5, C2, dtype=jnp.float32)
    loss2 = jax.block_until_ready(
        focal_loss(logits2, target2, weight2, gamma=2.0, reduction="mean", tile_n=8))
    ref2 = _reference_focal_loss(logits2, target2, weight2, 2.0, "mean")
    assert jnp.allclose(loss2, ref2, rtol=1e-5, atol=1e-5), (loss2, ref2)

    # Case 2b: reduction='none' per-sample parity.
    loss2n = jax.block_until_ready(
        focal_loss(logits2, target2, weight2, gamma=2.0, reduction="none", tile_n=8))
    ref2n = _reference_focal_loss(logits2, target2, weight2, 2.0, "none")
    assert jnp.allclose(loss2n, ref2n, rtol=1e-5, atol=1e-5), (loss2n, ref2n)

    # Case 3: non-integer gamma (general pow path) + 'sum' reduction.
    loss3 = jax.block_until_ready(
        focal_loss(logits2, target2, weight2, gamma=1.5, reduction="sum", tile_n=8))
    ref3 = _reference_focal_loss(logits2, target2, weight2, 1.5, "sum")
    assert jnp.allclose(loss3, ref3, rtol=1e-5, atol=1e-5), (loss3, ref3)

    # Case 4: bf16 logits flow through the kernel natively (no upfront f32 cast).
    N4, C4 = 16, 16
    logits4 = jax.random.normal(k5, (N4, C4), dtype=jnp.bfloat16)
    target4 = jax.random.randint(k6, (N4,), 0, C4, dtype=jnp.int32)
    weight4 = jnp.ones((C4,), jnp.float32)
    loss4 = jax.block_until_ready(focal_loss(logits4, target4, weight4, gamma=2.0))
    ref4 = _reference_focal_loss(logits4, target4, weight4, 2.0)
    assert jnp.allclose(loss4, ref4, rtol=2e-2, atol=2e-2), (loss4, ref4)

    print("KERNEL_OK")
</pallas_src>

<mosaic_0001>
module attributes {stable_mosaic.version = 11 : i64} {
  func.func @_focal_loss_kernel(%arg0: i32, %arg1: memref<8x16xf32, #tpu.memory_space<vmem>>, %arg2: memref<8x1xi32, #tpu.memory_space<vmem>>, %arg3: memref<1x16xi32, #tpu.memory_space<vmem>>, %arg4: memref<8x1xf32, #tpu.memory_space<vmem>>) attributes {dimension_semantics = [#tpu.dimension_semantics<parallel>], iteration_bounds = array<i64: 1>, scalar_prefetch = 0 : i64, scratch_operands = 0 : i64, tpu.core_type = #tpu.core_type<tc>, window_params = [{transform_indices = @transform_0, window_bounds = array<i64: 8, 16>}, {transform_indices = @transform_1, window_bounds = array<i64: 8, 1>}, {pipeline_mode = #tpu.pipeline_mode<synchronous>, transform_indices = @transform_2, window_bounds = array<i64: 1, 16>}, {transform_indices = @transform_3, window_bounds = array<i64: 8, 1>}]} {
    %c0 = arith.constant 0 : index
    %c0_0 = arith.constant 0 : index
    %0 = vector.load %arg1[%c0, %c0_0] : memref<8x16xf32, #tpu.memory_space<vmem>>, vector<8x16xf32>
    %c0_1 = arith.constant 0 : index
    %c0_2 = arith.constant 0 : index
    %1 = vector.load %arg2[%c0_1, %c0_2] : memref<8x1xi32, #tpu.memory_space<vmem>>, vector<8x1xi32>
    %c0_3 = arith.constant 0 : index
    %c0_4 = arith.constant 0 : index
    %2 = vector.load %arg3[%c0_3, %c0_4] : memref<1x16xi32, #tpu.memory_space<vmem>>, vector<1x16xi32>
    %cst = arith.constant dense<0xFF800000> : vector<8xf32>
    %3 = vector.multi_reduction <maximumf>, %0, %cst [1] : vector<8x16xf32> to vector<8xf32>
    %4 = vector.shape_cast %3 : vector<8xf32> to vector<8x1xf32>
    %5 = vector.broadcast %4 : vector<8x1xf32> to vector<8x16xf32>
    %6 = arith.subf %0, %5 : vector<8x16xf32>
    %7 = math.exp %6 : vector<8x16xf32>
    %cst_5 = arith.constant dense<0.000000e+00> : vector<8xf32>
    %8 = vector.multi_reduction <add>, %7, %cst_5 [1] : vector<8x16xf32> to vector<8xf32>
    %9 = vector.shape_cast %8 : vector<8xf32> to vector<8x1xf32>
    %10 = vector.broadcast %2 : vector<1x16xi32> to vector<8x16xi32>
    %11 = vector.broadcast %1 : vector<8x1xi32> to vector<8x16xi32>
    %12 = arith.cmpi eq, %10, %11 : vector<8x16xi32>
    %c0_i32 = arith.constant 0 : i32
    %13 = arith.sitofp %c0_i32 : i32 to f32
    %14 = vector.broadcast %13 : f32 to vector<8x16xf32>
    %15 = arith.select %12, %0, %14 : vector<8x16xi1>, vector<8x16xf32>
    %cst_6 = arith.constant dense<0.000000e+00> : vector<8xf32>
    %16 = vector.multi_reduction <add>, %15, %cst_6 [1] : vector<8x16xf32> to vector<8xf32>
    %17 = vector.shape_cast %16 : vector<8xf32> to vector<8x1xf32>
    %18 = arith.subf %17, %4 : vector<8x1xf32>
    %19 = math.log %9 : vector<8x1xf32>
    %20 = arith.subf %18, %19 : vector<8x1xf32>
    %21 = math.exp %20 : vector<8x1xf32>
    %cst_7 = arith.constant 1.000000e+00 : f32
    %22 = vector.broadcast %cst_7 : f32 to vector<8x1xf32>
    %23 = arith.subf %22, %21 : vector<8x1xf32>
    %24 = arith.mulf %23, %23 : vector<8x1xf32>
    %cst_8 = arith.constant 0.000000e+00 : f32
    %25 = vector.broadcast %cst_8 : f32 to vector<8x1xf32>
    %26 = arith.subf %25, %20 : vector<8x1xf32>
    %27 = arith.mulf %24, %26 : vector<8x1xf32>
    %c0_9 = arith.constant 0 : index
    %c0_10 = arith.constant 0 : index
    %28 = vector.load %arg4[%c0_9, %c0_10] : memref<8x1xf32, #tpu.memory_space<vmem>>, vector<8x1xf32>
    tpu.vector_store %arg4[%c0_9, %c0_10], %27 {strides = array<i32>} : memref<8x1xf32, #tpu.memory_space<vmem>>, vector<8x1xf32>,
    return
  }
  func.func @transform_0(%arg0: i32) -> (i32, i32) {
    %c0_i32 = arith.constant 0 : i32
    %c0_i32_0 = arith.constant 0 : i32
    return %arg0, %c0_i32 : i32, i32
  }
  func.func @transform_1(%arg0: i32) -> (i32, i32) {
    %c0_i32 = arith.constant 0 : i32
    %c0_i32_0 = arith.constant 0 : i32
    return %arg0, %c0_i32 : i32, i32
  }
  func.func @transform_2(%arg0: i32) -> (i32, i32) {
    %c0_i32 = arith.constant 0 : i32
    %c0_i32_0 = arith.constant 0 : i32
    %c0_i32_1 = arith.constant 0 : i32
    return %c0_i32, %c0_i32_0 : i32, i32
  }
  func.func @transform_3(%arg0: i32) -> (i32, i32) {
    %c0_i32 = arith.constant 0 : i32
    %c0_i32_0 = arith.constant 0 : i32
    return %arg0, %c0_i32 : i32, i32
  }
}

</mosaic_0001>

<llo_original>
// kernel: tpu_custom_call.1
$region0: #{tpu_custom_call.1}
  #allocation0 [shape = 'u32[]', space=smem, size = 0x4, offset = 0x4, fixed_abs, tag = 'smem constant byte address 0x4 - core index']
  #allocation1 [shape = 'u32[144,128]{1,0:T(1,128)}', space=vmem, size = 0x12000, scoped, tag = 'internal scratch']
  %s0 = inlined_call_operand.vmem [shape: f32[8,16], index: 0, kind: input, shape index: {}]
  %s1 = inlined_call_operand.vmem [shape: s32[8,1], index: 1, kind: input, shape index: {}]
  %s2 = inlined_call_operand.vmem [shape: s32[1,16], index: 2, kind: input, shape index: {}]
  %s3 = inlined_call_operand.vmem [shape: f32[8,1], index: 3, kind: output, shape index: {}]
  %s4 = sld [smem:[#allocation0]]
  $region22: #{tpu_custom_call.1} parent=0
    _
  %s6 = ssub.s32 1, %s4
  %s7 = scalar_select 0, %s6, %s4
  // Predicated region
  $region2: #{tpu_custom_call.1} parent=0 // pred_check
    _
  $region3: #{tpu_custom_call.1} parent=0 // pred_check_branch
    %9 = sbr.rel (0) target = $region5
  $region4: #{tpu_custom_call.1} parent=0 // pred_region
    _
  $region5: #{tpu_custom_call.1} parent=0 // pred_fallthru
    _
  // Predicated region
  $region6: #{tpu_custom_call.1} parent=0 // pred_check
    _
  $region7: #{tpu_custom_call.1} parent=0 // pred_check_branch
    %11 = sbr.rel (0) target = $region9
  $region8: #{tpu_custom_call.1} parent=0 // pred_region
    _
  $region9: #{tpu_custom_call.1} parent=0 // pred_fallthru
    _
  // Predicated region
  $region10: #{tpu_custom_call.1} parent=0 // pred_check
    _
  $region11: #{tpu_custom_call.1} parent=0 // pred_check_branch
    %13 = sbr.rel (0) target = $region13
  $region12: #{tpu_custom_call.1} parent=0 // pred_region
    _
  $region13: #{tpu_custom_call.1} parent=0 // pred_fallthru
    _
  %v14 = vld [vmem:[%s0] sm:$0xff]
  %v15 = vld [vmem:[%s1] sm:$0xff]
  %v16 = vld [vmem:[%s2] sm:$0x1]
  %vm17 = vcmask 130048
  %v18 = vsel %vm17, %v14, -inf
  %19 = vmax.xlane.f32.xlu0 %v18
  %v20 = vpop.xlane.xlu0 %19
  %v21 = vsub.f32 %v14, %v20
  %v22 = vmul.f32 %v21, 1.442695
  %v23 = vpow.pop %v22
  %v24 = vsel %vm17, %v23, 0.0
  %25 = vadd.xlane.f32.xlu0 %v24
  %v26 = vpop.xlane.xlu0 %25
  %v27 = vlaneseq
  %v28 = vshrl.u32 %v27, 7
  %v29 = vsub.s32 0, %v28
  %v30 = vrot.slane %v16, %v29
  %31 = vset.pattern.permute.xlu0 0
  %32 = vperm.xlu0 %31, %v15
  %v33 = vpop.permute.xlu0 %32
  %vm34 = vcmp.eq.s32.totalorder %v30, %v33
  %v35 = vsel %vm34, %v14, 0.0
  %v36 = vsel %vm17, %v35, 0.0
  %37 = vadd.xlane.f32.xlu0 %v36
  %v38 = vpop.xlane.xlu0 %37
  %v39 = vsub.f32 %v38, %v20
  %v40 = vlog2.pop %v26
  %v41 = vmul.f32 %v40, 0.6931472
  %v42 = vsub.f32 %v39, %v41
  %v43 = vmul.f32 %v42, 1.442695
  %v44 = vpow.pop %v43
  %v45 = vsub.f32 1.0, %v44
  %v46 = vmul.f32 %v45, %v45
  %v47 = vsub.f32 0.0, %v42
  %v48 = vmul.f32 %v46, %v47
  %vm49 = vcmask 7168
  %50 = vst.msk [vmem:[%s3] sm:$0xff] %vm49, %v48
  // Predicated region
  $region14: #{tpu_custom_call.1} parent=0 // pred_check
    _
  $region15: #{tpu_custom_call.1} parent=0 // pred_check_branch
    %52 = sbr.rel (0) target = $region17
  $region16: #{tpu_custom_call.1} parent=0 // pred_region
    _
  $region17: #{tpu_custom_call.1} parent=0 // pred_fallthru
    _
  // Predicated region
  $region18: #{tpu_custom_call.1} parent=0 // pred_check
    _
  $region19: #{tpu_custom_call.1} parent=0 // pred_check_branch
    %54 = sbr.rel (0) target = $region21
  $region20: #{tpu_custom_call.1} parent=0 // pred_region
    _
  $region21: #{tpu_custom_call.1} parent=0 // pred_fallthru
    _

</llo_original>
